<compile_context>
chip_gen: v7x
topology: tpu7x:2x2x1
jax: 0.10.0
libtpu: 0.0.40
codegen_flags: <defaults>
</compile_context>

<pallas_src>
import functools

import numpy as np
import jax
import jax.numpy as jnp
from jax.experimental import pallas as pl
from jax.experimental.pallas import tpu as pltpu

_LANE = 128
_SUBLANE_BF16 = 16      # bf16 rows pack 16-deep per vreg sublane group
_BLOCK_M = 512          # row tile used once M exceeds it (review: 512-1024)


def _ceil_to(a, b):
    return -(-a // b) * b


def _maybe_vmem_limit(bytes_per_step):
    """Only raise the scoped-VMEM limit when the pipelined footprint needs it."""
    if bytes_per_step <= 8 * 1024 * 1024:
        return None                          # default scoped limit is plenty
    return min(_ceil_to(int(bytes_per_step * 1.25), 1 << 20), 64 * 1024 * 1024)


# --------------------------------- kernels --------------------------------- #
def _fused_transform_kernel(tile_type_ref, tile_row_ref,   # scalar prefetch
                            x_ref, d_ref, w1_ref, w2_ref, b_ref, o_ref,
                            *, negative_slope):
    # h_tile = leaky_relu([x @ W1 | deg @ W2] + b)   (bf16 operands, f32 acc)
    acc = jnp.dot(x_ref[...], w1_ref[...], preferred_element_type=jnp.float32)
    acc = acc + jnp.dot(d_ref[...], w2_ref[...], preferred_element_type=jnp.float32)
    acc = acc + b_ref[...]
    acc = jnp.where(acc >= 0.0, acc, negative_slope * acc)
    o_ref[...] = acc.astype(o_ref.dtype)


def _linear_kernel(x_ref, w_ref, b_ref, o_ref):
    acc = jnp.dot(x_ref[...], w_ref[...], preferred_element_type=jnp.float32)
    o_ref[...] = (acc + b_ref[...]).astype(o_ref.dtype)


# -------------------------------- wrappers --------------------------------- #
def fused_input_transform(x_packed, deg_onehot, w1_stack, w2_stack, b_stack,
                          tile_type, tile_row, *, tm, negative_slope=0.9):
    """Single launch for every node type: leaky_relu([x_i@W1_i | deg_i@W2_i]+b_i)."""
    n_rows, kmax = x_packed.shape
    _, dd = deg_onehot.shape
    _, _, n_pad = w1_stack.shape
    n_tiles = int(tile_type.shape[0])

    bytes_per_step = (2 * tm * (kmax + dd) * 2           # bf16 in tiles (2-buf)
                      + 2 * (kmax + dd) * n_pad * 2      # bf16 weight blocks
                      + 2 * n_pad * 4                    # f32 bias block
                      + 2 * tm * n_pad * 2)              # bf16 out tile (2-buf)

    grid_spec = pltpu.PrefetchScalarGridSpec(
        num_scalar_prefetch=2,
        grid=(n_tiles,),
        in_specs=[
            pl.BlockSpec((tm, kmax), lambda i, tt, tr: (tr[i], 0)),
            pl.BlockSpec((tm, dd), lambda i, tt, tr: (tr[i], 0)),
            pl.BlockSpec((None, kmax, n_pad), lambda i, tt, tr: (tt[i], 0, 0)),
            pl.BlockSpec((None, dd, n_pad), lambda i, tt, tr: (tt[i], 0, 0)),
            pl.BlockSpec((None, 1, n_pad), lambda i, tt, tr: (tt[i], 0, 0)),
        ],
        out_specs=pl.BlockSpec((tm, n_pad), lambda i, tt, tr: (tr[i], 0)),
    )
    kernel = functools.partial(_fused_transform_kernel,
                               negative_slope=negative_slope)
    return pl.pallas_call(
        kernel,
        out_shape=jax.ShapeDtypeStruct((n_rows, n_pad), jnp.bfloat16),
        grid_spec=grid_spec,
        compiler_params=pltpu.CompilerParams(
            # data-dependent output index map -> keep this axis "arbitrary"
            dimension_semantics=("arbitrary",),
            vmem_limit_bytes=_maybe_vmem_limit(bytes_per_step)),
    )(tile_type, tile_row, x_packed, deg_onehot, w1_stack, w2_stack, b_stack)


def pallas_linear(x, w, b, *, out_dtype=jnp.float32, block_m=_BLOCK_M):
    """x @ w + b with a lane-dense (multiple-of-128) output width."""
    m, k = x.shape
    kw, n = w.shape
    assert k == kw and b.shape == (1, n)
    if m <= block_m:
        tm, grid = m, (1,)                  # block == full array: no padding
    else:
        tm, grid = block_m, (pl.cdiv(m, block_m),)

    bytes_per_step = (2 * tm * k * np.dtype(x.dtype).itemsize
                      + k * n * np.dtype(w.dtype).itemsize + n * 4
                      + 2 * tm * n * np.dtype(out_dtype).itemsize)
    return pl.pallas_call(
        _linear_kernel,
        out_shape=jax.ShapeDtypeStruct((m, n), out_dtype),
        grid=grid,
        in_specs=[
            pl.BlockSpec((tm, k), lambda i: (i, 0)),    # row-tiled activations
            pl.BlockSpec((k, n), lambda i: (0, 0)),     # weight resident
            pl.BlockSpec((1, n), lambda i: (0, 0)),     # bias resident
        ],
        out_specs=pl.BlockSpec((tm, n), lambda i: (i, 0)),
        compiler_params=pltpu.CompilerParams(
            dimension_semantics=("parallel",),
            vmem_limit_bytes=_maybe_vmem_limit(bytes_per_step)),
    )(x, w, b)


# --------------------------- parameter creation ----------------------------- #
def _xavier_normal(key, shape, gain=1.414):
    fan_out, fan_in = shape
    std = gain * (2.0 / (fan_in + fan_out)) ** 0.5
    return std * jax.random.normal(key, shape, jnp.float32)


def init_params(key, feats_dim_list, degree_dim, hidden_dim, out_dim):
    """Weights pre-transposed / stacked / lane-padded / bf16-cast once at init."""
    n_types = len(feats_dim_list)
    k_max = max(feats_dim_list)
    h = hidden_dim
    n_pad = _ceil_to(2 * h, _LANE)              # lane-dense fused output width

    w1_stack = np.zeros((n_types, k_max, n_pad), np.float32)
    w2_stack = np.zeros((n_types, degree_dim, n_pad), np.float32)
    b_stack = np.zeros((n_types, 1, n_pad), np.float32)
    for t, fd in enumerate(feats_dim_list):
        key, k1, k2, k3, k4 = jax.random.split(key, 5)
        w1 = np.asarray(_xavier_normal(k1, (h, fd)))             # torch (out,in)
        b1 = 0.01 * np.asarray(jax.random.normal(k2, (h,), jnp.float32))
        w2 = np.asarray(_xavier_normal(k3, (h, degree_dim)))
        b2 = 0.01 * np.asarray(jax.random.normal(k4, (h,), jnp.float32))
        w1_stack[t, :fd, :h] = w1.T              # left half  of the 2H output
        w2_stack[t, :, h:2 * h] = w2.T           # right half of the 2H output
        b_stack[t, 0, :h] = b1
        b_stack[t, 0, h:2 * h] = b2

    key, k5, k6 = jax.random.split(key, 3)
    w_fc = np.asarray(_xavier_normal(k5, (out_dim, 2 * h)))
    b_fc = 0.01 * np.asarray(jax.random.normal(k6, (out_dim,), jnp.float32))
    out_pad = _ceil_to(out_dim, _LANE)
    w_fc_p = np.zeros((n_pad, out_pad), np.float32)   # K padded: h pad cols are 0
    w_fc_p[:2 * h, :out_dim] = w_fc.T
    b_fc_p = np.zeros((1, out_pad), np.float32)
    b_fc_p[0, :out_dim] = b_fc

    return {
        "w1": jnp.asarray(w1_stack, jnp.bfloat16),
        "w2": jnp.asarray(w2_stack, jnp.bfloat16),
        "b": jnp.asarray(b_stack, jnp.float32),
        "w_fc": jnp.asarray(w_fc_p, jnp.bfloat16),
        "b_fc": jnp.asarray(b_fc_p, jnp.float32),
        "hidden_dim": h,
        "out_dim": out_dim,
        "n_pad": n_pad,
    }


# --------------------------- static input packing --------------------------- #
def prepare_static_inputs(features_list, type_mask, degree_onehot,
                          *, block_m=_BLOCK_M):
    """Pack the static node features / degree one-hots ONCE (outside forward).

    Rows are laid out type-block by type-block, each block zero-padded up to a
    multiple of the row tile so every grid tile touches exactly one type.
    """
    type_mask = np.asarray(type_mask)
    degree_onehot = np.asarray(degree_onehot, np.float32)
    n_types = len(features_list)
    feats_dims = [int(np.asarray(f).shape[1]) for f in features_list]
    k_max = max(feats_dims)
    counts = [int(np.sum(type_mask == t)) for t in range(n_types)]
    tm = min(block_m, _ceil_to(max(counts), _SUBLANE_BF16))
    pad_counts = [_ceil_to(c, tm) for c in counts]
    n_packed = sum(pad_counts)

    x_packed = np.zeros((n_packed, k_max), np.float32)
    d_packed = np.zeros((n_packed, degree_onehot.shape[1]), np.float32)
    node_to_row = np.zeros(type_mask.shape[0], np.int32)
    tile_type, tile_row = [], []
    row = 0
    for t in range(n_types):
        idx = np.where(type_mask == t)[0]
        f = np.asarray(features_list[t], np.float32)
        assert f.shape[0] == idx.size
        x_packed[row:row + idx.size, :feats_dims[t]] = f
        d_packed[row:row + idx.size] = degree_onehot[idx]
        node_to_row[idx] = row + np.arange(idx.size, dtype=np.int32)
        n_tiles_t = pad_counts[t] // tm
        tile_type += [t] * n_tiles_t
        tile_row += [(row // tm) + r for r in range(n_tiles_t)]
        row += pad_counts[t]

    return {
        "x": jnp.asarray(x_packed, jnp.bfloat16),          # cast once, not per fwd
        "deg": jnp.asarray(d_packed, jnp.bfloat16),
        "tile_type": jnp.asarray(np.asarray(tile_type, np.int32)),
        "tile_row": jnp.asarray(np.asarray(tile_row, np.int32)),
        "tm": tm,
        "node_to_row": node_to_row,
    }


# ------------------------------ forward pass -------------------------------- #
def pohgnn_forward(params, static, target_node_indices):
    h_dim = params["hidden_dim"]
    out_dim = params["out_dim"]

    # One fused launch: per-type fc + fc_c + bias + LeakyReLU, bf16 lane-dense h.
    h_pad = fused_input_transform(
        static["x"], static["deg"], params["w1"], params["w2"], params["b"],
        static["tile_type"], static["tile_row"], tm=static["tm"],
        negative_slope=0.9)                                   # (N_packed, 128) bf16

    # feat_drop: dropout in eval mode -> identity (deterministic kernel).
    # TODO(synk): POHGNN_ctr_ntype_specific (metapath aggregation) is not in the
    # provided source; its per-type outputs are replaced by identity on h.
    h_agg = h_pad

    # Gather ONLY the target rows before the classifier (cuts final-fc traffic).
    tgt_rows = static["node_to_row"][np.asarray(target_node_indices)]
    h_tgt = h_agg[jnp.asarray(tgt_rows)]                      # (n_tgt, 128) bf16

    logits_p = pallas_linear(h_tgt, params["w_fc"], params["b_fc"])
    logits = logits_p[:, :out_dim]                            # one tiny slice
    h_out = h_tgt[:, :2 * h_dim].astype(jnp.float32)
    return logits, h_out


# ----------------------------------- main ----------------------------------- #
if __name__ == "__main__":
    key = jax.random.PRNGKey(0)

    # small synthetic heterograph
    num_types = 3
    nodes_per_type = 16
    N = num_types * nodes_per_type
    hidden_dim = 32
    out_dim = 8
    feats_dim_list = [12, 10, 14]

    type_mask = np.repeat(np.arange(num_types), nodes_per_type)          # (N,)

    # degrees (as in __init__: count / count2 per node of adjD) -> static one-hot
    rng = np.random.RandomState(0)
    count = rng.randint(1, 5, size=N)
    count2 = rng.randint(1, 4, size=N)
    all_deg = np.array(sorted(set(count.tolist())))
    all_deg2 = np.array(sorted(set(count2.tolist())))
    degree_index = np.searchsorted(all_deg, count)
    degree_index2 = np.searchsorted(all_deg2, count2)
    degree_onehot = np.concatenate(
        [np.eye(len(all_deg), dtype=np.float32)[degree_index],
         np.eye(len(all_deg2), dtype=np.float32)[degree_index2]], axis=1)  # (N, D)
    degree_dim = degree_onehot.shape[1]

    # per-type raw node features (static graph data)
    features_list = []
    for i, fd in enumerate(feats_dim_list):
        key, sub = jax.random.split(key)
        features_list.append(
            np.asarray(jax.random.normal(sub, (nodes_per_type, fd), jnp.float32)))

    key, pkey = jax.random.split(key)
    params = init_params(pkey, feats_dim_list, degree_dim, hidden_dim, out_dim)
    static = prepare_static_inputs(features_list, type_mask, degree_onehot)

    target_node_indices = np.arange(nodes_per_type)          # the type-0 nodes

    logits, h = pohgnn_forward(params, static, target_node_indices)
    logits = jax.block_until_ready(logits)
    h = jax.block_until_ready(h)

    assert logits.shape == (len(target_node_indices), out_dim)
    assert h.shape == (len(target_node_indices), 2 * hidden_dim)
    assert bool(jnp.all(jnp.isfinite(logits))) and bool(jnp.all(jnp.isfinite(h)))

    # pure-JAX/numpy reference (same bf16 rounding of weights/inputs) to check
    # packing, per-type weight selection, bias/LeakyReLU fusion and the final fc.
    def reference_forward():
        f32 = lambda a: np.asarray(jnp.asarray(a, jnp.float32))
        H = hidden_dim
        h_ref = np.zeros((N, 2 * H), np.float32)
        for t, fd in enumerate(feats_dim_list):
            idx = np.where(type_mask == t)[0]
            w1 = f32(params["w1"][t, :fd, :H])
            w2 = f32(params["w2"][t, :, H:2 * H])
            b1 = f32(params["b"][t, 0, :H])
            b2 = f32(params["b"][t, 0, H:2 * H])
            xf = f32(jnp.asarray(features_list[t]).astype(jnp.bfloat16))
            df = f32(jnp.asarray(degree_onehot[idx]).astype(jnp.bfloat16))
            y = np.concatenate([xf @ w1 + b1, df @ w2 + b2], axis=1)
            h_ref[idx] = np.where(y >= 0, y, 0.9 * y)
        w_fc = f32(params["w_fc"][:2 * H, :out_dim])
        b_fc = f32(params["b_fc"][0, :out_dim])
        h_t = h_ref[target_node_indices]
        h_t_bf = f32(jnp.asarray(h_t).astype(jnp.bfloat16))
        return h_t_bf @ w_fc + b_fc, h_t

    ref_logits, ref_h = reference_forward()
    np.testing.assert_allclose(np.asarray(logits), ref_logits, rtol=5e-2, atol=5e-2)
    np.testing.assert_allclose(np.asarray(h), ref_h, rtol=5e-2, atol=5e-2)

    print("KERNEL_OK")
</pallas_src>

<mosaic_0001>
module attributes {stable_mosaic.version = 11 : i64} {
  func.func @_fused_transform_kernel(%arg0: i32, %arg1: memref<3xi32, #tpu.memory_space<smem>>, %arg2: memref<3xi32, #tpu.memory_space<smem>>, %arg3: memref<16x14xbf16, #tpu.memory_space<vmem>>, %arg4: memref<16x7xbf16, #tpu.memory_space<vmem>>, %arg5: memref<1x14x128xbf16, #tpu.memory_space<vmem>>, %arg6: memref<1x7x128xbf16, #tpu.memory_space<vmem>>, %arg7: memref<1x1x128xf32, #tpu.memory_space<vmem>>, %arg8: memref<16x128xbf16, #tpu.memory_space<vmem>>) attributes {dimension_semantics = [#tpu.dimension_semantics<arbitrary>], iteration_bounds = array<i64: 3>, scalar_prefetch = 2 : i64, scratch_operands = 0 : i64, tpu.core_type = #tpu.core_type<tc>, window_params = [{transform_indices = @transform_0, window_bounds = array<i64: 16, 14>}, {transform_indices = @transform_1, window_bounds = array<i64: 16, 7>}, {transform_indices = @transform_2, window_bounds = array<i64: 1, 14, 128>}, {transform_indices = @transform_3, window_bounds = array<i64: 1, 7, 128>}, {transform_indices = @transform_4, window_bounds = array<i64: 1, 1, 128>}, {transform_indices = @transform_5, window_bounds = array<i64: 16, 128>}]} {
    %c0 = arith.constant 0 : index
    %c0_0 = arith.constant 0 : index
    %0 = vector.load %arg3[%c0, %c0_0] : memref<16x14xbf16, #tpu.memory_space<vmem>>, vector<16x14xbf16>
    %c0_1 = arith.constant 0 : index
    %c0_2 = arith.constant 0 : index
    %c0_3 = arith.constant 0 : index
    %1 = vector.load %arg5[%c0_1, %c0_2, %c0_3] : memref<1x14x128xbf16, #tpu.memory_space<vmem>>, vector<1x14x128xbf16>
    %2 = vector.shape_cast %1 : vector<1x14x128xbf16> to vector<14x128xbf16>
    %cst = arith.constant dense<0.000000e+00> : vector<16x128xf32>
    %3 = tpu.matmul %0, %2, %cst {dimension_numbers = #tpu.dot_dimension_numbers<[1], [0], [0], [1], [0, 0, 1, 1], [], []>} : vector<16x14xbf16>, vector<14x128xbf16>, vector<16x128xf32> -> vector<16x128xf32>
    %c0_4 = arith.constant 0 : index
    %c0_5 = arith.constant 0 : index
    %4 = vector.load %arg4[%c0_4, %c0_5] : memref<16x7xbf16, #tpu.memory_space<vmem>>, vector<16x7xbf16>
    %c0_6 = arith.constant 0 : index
    %c0_7 = arith.constant 0 : index
    %c0_8 = arith.constant 0 : index
    %5 = vector.load %arg6[%c0_6, %c0_7, %c0_8] : memref<1x7x128xbf16, #tpu.memory_space<vmem>>, vector<1x7x128xbf16>
    %6 = vector.shape_cast %5 : vector<1x7x128xbf16> to vector<7x128xbf16>
    %cst_9 = arith.constant dense<0.000000e+00> : vector<16x128xf32>
    %7 = tpu.matmul %4, %6, %cst_9 {dimension_numbers = #tpu.dot_dimension_numbers<[1], [0], [0], [1], [0, 0, 1, 1], [], []>} : vector<16x7xbf16>, vector<7x128xbf16>, vector<16x128xf32> -> vector<16x128xf32>
    %8 = arith.addf %3, %7 : vector<16x128xf32>
    %c0_10 = arith.constant 0 : index
    %c0_11 = arith.constant 0 : index
    %c0_12 = arith.constant 0 : index
    %9 = vector.load %arg7[%c0_10, %c0_11, %c0_12] : memref<1x1x128xf32, #tpu.memory_space<vmem>>, vector<1x1x128xf32>
    %10 = vector.shape_cast %9 : vector<1x1x128xf32> to vector<1x128xf32>
    %11 = vector.broadcast %10 : vector<1x128xf32> to vector<16x128xf32>
    %12 = arith.addf %8, %11 : vector<16x128xf32>
    %cst_13 = arith.constant 0.000000e+00 : f32
    %13 = vector.broadcast %cst_13 : f32 to vector<16x128xf32>
    %14 = arith.cmpf oge, %12, %13 : vector<16x128xf32>
    %cst_14 = arith.constant 0.899999976 : f32
    %15 = vector.broadcast %cst_14 : f32 to vector<16x128xf32>
    %16 = arith.mulf %15, %12 : vector<16x128xf32>
    %17 = arith.select %14, %12, %16 : vector<16x128xi1>, vector<16x128xf32>
    %18 = arith.truncf %17 : vector<16x128xf32> to vector<16x128xbf16>
    %c0_15 = arith.constant 0 : index
    %c0_16 = arith.constant 0 : index
    %19 = vector.load %arg8[%c0_15, %c0_16] : memref<16x128xbf16, #tpu.memory_space<vmem>>, vector<16x128xbf16>
    tpu.vector_store %arg8[%c0_15, %c0_16], %18 {strides = array<i32>} : memref<16x128xbf16, #tpu.memory_space<vmem>>, vector<16x128xbf16>,
    return
  }
  func.func @transform_0(%arg0: i32, %arg1: memref<3xi32, #tpu.memory_space<smem>>, %arg2: memref<3xi32, #tpu.memory_space<smem>>) -> (i32, i32) {
    %0 = arith.index_cast %arg0 : i32 to index
    %1 = memref.load %arg2[%0] : memref<3xi32, #tpu.memory_space<smem>>
    %c0_i32 = arith.constant 0 : i32
    %c0_i32_0 = arith.constant 0 : i32
    return %1, %c0_i32 : i32, i32
  }
  func.func @transform_1(%arg0: i32, %arg1: memref<3xi32, #tpu.memory_space<smem>>, %arg2: memref<3xi32, #tpu.memory_space<smem>>) -> (i32, i32) {
    %0 = arith.index_cast %arg0 : i32 to index
    %1 = memref.load %arg2[%0] : memref<3xi32, #tpu.memory_space<smem>>
    %c0_i32 = arith.constant 0 : i32
    %c0_i32_0 = arith.constant 0 : i32
    return %1, %c0_i32 : i32, i32
  }
  func.func @transform_2(%arg0: i32, %arg1: memref<3xi32, #tpu.memory_space<smem>>, %arg2: memref<3xi32, #tpu.memory_space<smem>>) -> (i32, i32, i32) {
    %0 = arith.index_cast %arg0 : i32 to index
    %1 = memref.load %arg1[%0] : memref<3xi32, #tpu.memory_space<smem>>
    %c0_i32 = arith.constant 0 : i32
    %c0_i32_0 = arith.constant 0 : i32
    %c0_i32_1 = arith.constant 0 : i32
    return %1, %c0_i32, %c0_i32_0 : i32, i32, i32
  }
  func.func @transform_3(%arg0: i32, %arg1: memref<3xi32, #tpu.memory_space<smem>>, %arg2: memref<3xi32, #tpu.memory_space<smem>>) -> (i32, i32, i32) {
    %0 = arith.index_cast %arg0 : i32 to index
    %1 = memref.load %arg1[%0] : memref<3xi32, #tpu.memory_space<smem>>
    %c0_i32 = arith.constant 0 : i32
    %c0_i32_0 = arith.constant 0 : i32
    %c0_i32_1 = arith.constant 0 : i32
    return %1, %c0_i32, %c0_i32_0 : i32, i32, i32
  }
  func.func @transform_4(%arg0: i32, %arg1: memref<3xi32, #tpu.memory_space<smem>>, %arg2: memref<3xi32, #tpu.memory_space<smem>>) -> (i32, i32, i32) {
    %0 = arith.index_cast %arg0 : i32 to index
    %1 = memref.load %arg1[%0] : memref<3xi32, #tpu.memory_space<smem>>
    %c0_i32 = arith.constant 0 : i32
    %c0_i32_0 = arith.constant 0 : i32
    %c0_i32_1 = arith.constant 0 : i32
    return %1, %c0_i32, %c0_i32_0 : i32, i32, i32
  }
  func.func @transform_5(%arg0: i32, %arg1: memref<3xi32, #tpu.memory_space<smem>>, %arg2: memref<3xi32, #tpu.memory_space<smem>>) -> (i32, i32) {
    %0 = arith.index_cast %arg0 : i32 to index
    %1 = memref.load %arg2[%0] : memref<3xi32, #tpu.memory_space<smem>>
    %c0_i32 = arith.constant 0 : i32
    %c0_i32_0 = arith.constant 0 : i32
    return %1, %c0_i32 : i32, i32
  }
}

</mosaic_0001>

<llo_original>
// kernel: tpu_custom_call.1
$region0: #{tpu_custom_call.1}
  #allocation0 [shape = 'u32[]', space=smem, size = 0x4, offset = 0x4, fixed_abs, tag = 'smem constant byte address 0x4 - core index']
  #allocation1 [shape = 'u32[144,128]{1,0:T(1,128)}', space=vmem, size = 0x12000, scoped, tag = 'internal scratch']
  #allocation2 [shape = 's32[1]{0}', space=sflag, size = 0x4, scoped, tag = 'scoped memory for tpu_custom_call.1']
  #allocation3 [shape = 'u8[512]{0}', space=smem, size = 0x200, scoped, tag = 'prefetched SMEM operand 0']
  #allocation4 [shape = 'u8[512]{0}', space=smem, size = 0x200, scoped, tag = 'prefetched SMEM operand 1']
  %s0 = inlined_call_operand.vmem [shape: s32[3], index: 0, kind: input, shape index: {}]
  %s1 = inlined_call_operand.vmem [shape: s32[3], index: 1, kind: input, shape index: {}]
  %s2 = inlined_call_operand.vmem [shape: bf16[48,14], index: 2, kind: input, shape index: {}]
  %s3 = inlined_call_operand.vmem [shape: bf16[48,7], index: 3, kind: input, shape index: {}]
  %s4 = inlined_call_operand.vmem [shape: bf16[3,14,128], index: 4, kind: input, shape index: {}]
  %s5 = inlined_call_operand.vmem [shape: bf16[3,7,128], index: 5, kind: input, shape index: {}]
  %s6 = inlined_call_operand.vmem [shape: f32[3,1,128], index: 6, kind: input, shape index: {}]
  %s7 = inlined_call_operand.hbm [shape: bf16[48,128], index: 7, kind: output, shape index: {}]
  %s8 = sld [smem:[#allocation0]]
  $region53: #{tpu_custom_call.1} parent=0
    _
  %s10 = ssub.s32 1, %s8
  %s11 = scalar_select 0, %s10, %s8
  %s12 = sshll.u32 %s0, 4
  %s13 = int_to_ptr.vmem [resolvable:$true] %s12
  %15 = dma.vmem_to_smem %s13, 16, [#allocation3], [#allocation2]
  %s16 = sshll.u32 %s1, 4
  %s17 = int_to_ptr.vmem [resolvable:$true] %s16
  %19 = dma.vmem_to_smem %s17, 16, [#allocation4], [#allocation2]
  %20 = dma.done [#allocation2], 32
  %21 = sfence
  $region1: #{tpu_custom_call.1} parent=0
    #allocation5 [shape = 'u8[8192]{0}', space=vmem, size = 0x2000, scoped, tag = 'output window, operand 0']
    #allocation6 [shape = 's32[2]{0}', space=sflag, size = 0x8, scoped, tag = 'scoped memory for tpu_custom_call.1']
    %22 = vsyncpa [#allocation6], 0
    %s23 = scalar_lea.sflag [#allocation6], 1
    %24 = vsyncpa %s23, 0
    loop: start=0, step=1, limit=5
    $region2: #{tpu_custom_call.1} parent=1 // loop_pre_header
      _
    $region3: #{tpu_custom_call.1} parent=1 // loop_header
      %s26 = sphi 0, %s30
      %p27 = scmp.ge.s32.totalorder %s26, 5
      %s38 = sphi 0, %s40
      %s41 = sphi 0, %s38
      %s42 = sphi 0, %s41
      %s58 = sphi 0, %s42
      %s66 = sphi 0, %s68
      %s69 = sphi 0, %s66
      %s70 = sphi 0, %s69
      %s86 = sphi 0, %s70
      %s94 = sphi 0, %s96
      %s97 = sphi 0, %s94
      %s98 = sphi 0, %s97
      %s114 = sphi 0, %s98
      %s122 = sphi 0, %s124
      %s125 = sphi 0, %s122
      %s126 = sphi 0, %s125
      %s142 = sphi 0, %s126
      %s150 = sphi 0, %s152
      %s153 = sphi 0, %s150
      %s154 = sphi 0, %s153
      %s170 = sphi 0, %s154
      %s178 = sphi 0, %s180
      %s181 = sphi 0, %s178
      %s182 = sphi 0, %s181
      %s198 = sphi 0, %s182
    $region4: #{tpu_custom_call.1} parent=1 // loop_header_branch
      %29 = sbr.rel (%p27) target = $region8
    $region5: #{tpu_custom_call.1} parent=1 // loop_body
      %s31 = ssub.s32 %s26, 1
      %s32 = ssub.s32 %s26, 2
      %s33 = sadd.s32 %s26, 1
      %s34 = sld [smem:[#allocation4 + %s26]]
      %s35 = sld [smem:[#allocation4 + %s33]]
      %s36 = ssub.s32 %s34, %s35
      %p37 = scmp.eq.s32.totalorder %s36, 0
      %s39 = sadd.s32 %s38, 1
      %s40 = scalar_select %p37, %s38, %s39
      %p43 = pneg %p37
      %p44 = scmp.eq.s32.totalorder %s26, 2
      %p45 = por %p43, %p44
      %p46 = scmp.ne.s32.totalorder %s38, %s41
      %p47 = scmp.eq.s32.totalorder %s26, 0
      %p48 = por %p46, %p47
      %p49 = scmp.ne.s32.totalorder %s38, %s41
      %p50 = scmp.eq.s32.totalorder %s31, 2
      %p51 = por %p49, %p50
      %p52 = scmp.ne.s32.totalorder %s41, %s42
      %p53 = scmp.eq.s32.totalorder %s31, 0
      %p54 = por %p52, %p53
      %p55 = scmp.ne.s32.totalorder %s41, %s42
      %p56 = scmp.eq.s32.totalorder %s32, 2
      %p57 = por %p55, %p56
      %p59 = scmp.ne.s32.totalorder %s42, %s58
      %p60 = scmp.eq.s32.totalorder %s32, 0
      %p61 = por %p59, %p60
      %s62 = sld [smem:[#allocation4 + %s26]]
      %s63 = sld [smem:[#allocation4 + %s33]]
      %s64 = ssub.s32 %s62, %s63
      %p65 = scmp.eq.s32.totalorder %s64, 0
      %s67 = sadd.s32 %s66, 1
      %s68 = scalar_select %p65, %s66, %s67
      %p71 = pneg %p65
      %p72 = scmp.eq.s32.totalorder %s26, 2
      %p73 = por %p71, %p72
      %p74 = scmp.ne.s32.totalorder %s66, %s69
      %p75 = scmp.eq.s32.totalorder %s26, 0
      %p76 = por %p74, %p75
      %p77 = scmp.ne.s32.totalorder %s66, %s69
      %p78 = scmp.eq.s32.totalorder %s31, 2
      %p79 = por %p77, %p78
      %p80 = scmp.ne.s32.totalorder %s69, %s70
      %p81 = scmp.eq.s32.totalorder %s31, 0
      %p82 = por %p80, %p81
      %p83 = scmp.ne.s32.totalorder %s69, %s70
      %p84 = scmp.eq.s32.totalorder %s32, 2
      %p85 = por %p83, %p84
      %p87 = scmp.ne.s32.totalorder %s70, %s86
      %p88 = scmp.eq.s32.totalorder %s32, 0
      %p89 = por %p87, %p88
      %s90 = sld [smem:[#allocation3 + %s26]]
      %s91 = sld [smem:[#allocation3 + %s33]]
      %s92 = ssub.s32 %s90, %s91
      %p93 = scmp.eq.s32.totalorder %s92, 0
      %s95 = sadd.s32 %s94, 1
      %s96 = scalar_select %p93, %s94, %s95
      %p99 = pneg %p93
      %p100 = scmp.eq.s32.totalorder %s26, 2
      %p101 = por %p99, %p100
      %p102 = scmp.ne.s32.totalorder %s94, %s97
      %p103 = scmp.eq.s32.totalorder %s26, 0
      %p104 = por %p102, %p103
      %p105 = scmp.ne.s32.totalorder %s94, %s97
      %p106 = scmp.eq.s32.totalorder %s31, 2
      %p107 = por %p105, %p106
      %p108 = scmp.ne.s32.totalorder %s97, %s98
      %p109 = scmp.eq.s32.totalorder %s31, 0
      %p110 = por %p108, %p109
      %p111 = scmp.ne.s32.totalorder %s97, %s98
      %p112 = scmp.eq.s32.totalorder %s32, 2
      %p113 = por %p111, %p112
      %p115 = scmp.ne.s32.totalorder %s98, %s114
      %p116 = scmp.eq.s32.totalorder %s32, 0
      %p117 = por %p115, %p116
      %s118 = sld [smem:[#allocation3 + %s26]]
      %s119 = sld [smem:[#allocation3 + %s33]]
      %s120 = ssub.s32 %s118, %s119
      %p121 = scmp.eq.s32.totalorder %s120, 0
      %s123 = sadd.s32 %s122, 1
      %s124 = scalar_select %p121, %s122, %s123
      %p127 = pneg %p121
      %p128 = scmp.eq.s32.totalorder %s26, 2
      %p129 = por %p127, %p128
      %p130 = scmp.ne.s32.totalorder %s122, %s125
      %p131 = scmp.eq.s32.totalorder %s26, 0
      %p132 = por %p130, %p131
      %p133 = scmp.ne.s32.totalorder %s122, %s125
      %p134 = scmp.eq.s32.totalorder %s31, 2
      %p135 = por %p133, %p134
      %p136 = scmp.ne.s32.totalorder %s125, %s126
      %p137 = scmp.eq.s32.totalorder %s31, 0
      %p138 = por %p136, %p137
      %p139 = scmp.ne.s32.totalorder %s125, %s126
      %p140 = scmp.eq.s32.totalorder %s32, 2
      %p141 = por %p139, %p140
      %p143 = scmp.ne.s32.totalorder %s126, %s142
      %p144 = scmp.eq.s32.totalorder %s32, 0
      %p145 = por %p143, %p144
      %s146 = sld [smem:[#allocation3 + %s26]]
      %s147 = sld [smem:[#allocation3 + %s33]]
      %s148 = ssub.s32 %s146, %s147
      %p149 = scmp.eq.s32.totalorder %s148, 0
      %s151 = sadd.s32 %s150, 1
      %s152 = scalar_select %p149, %s150, %s151
      %p155 = pneg %p149
      %p156 = scmp.eq.s32.totalorder %s26, 2
      %p157 = por %p155, %p156
      %p158 = scmp.ne.s32.totalorder %s150, %s153
      %p159 = scmp.eq.s32.totalorder %s26, 0
      %p160 = por %p158, %p159
      %p161 = scmp.ne.s32.totalorder %s150, %s153
      %p162 = scmp.eq.s32.totalorder %s31, 2
      %p163 = por %p161, %p162
      %p164 = scmp.ne.s32.totalorder %s153, %s154
      %p165 = scmp.eq.s32.totalorder %s31, 0
      %p166 = por %p164, %p165
      %p167 = scmp.ne.s32.totalorder %s153, %s154
      %p168 = scmp.eq.s32.totalorder %s32, 2
      %p169 = por %p167, %p168
      %p171 = scmp.ne.s32.totalorder %s154, %s170
      %p172 = scmp.eq.s32.totalorder %s32, 0
      %p173 = por %p171, %p172
      %s174 = sld [smem:[#allocation4 + %s26]]
      %s175 = sld [smem:[#allocation4 + %s33]]
      %s176 = ssub.s32 %s174, %s175
      %p177 = scmp.eq.s32.totalorder %s176, 0
      %s179 = sadd.s32 %s178, 1
      %s180 = scalar_select %p177, %s178, %s179
      %p183 = pneg %p177
      %p184 = scmp.eq.s32.totalorder %s26, 2
      %p185 = por %p183, %p184
      %p186 = scmp.ne.s32.totalorder %s178, %s181
      %p187 = scmp.eq.s32.totalorder %s26, 0
      %p188 = por %p186, %p187
      %p189 = scmp.ne.s32.totalorder %s178, %s181
      %p190 = scmp.eq.s32.totalorder %s31, 2
      %p191 = por %p189, %p190
      %p192 = scmp.ne.s32.totalorder %s181, %s182
      %p193 = scmp.eq.s32.totalorder %s31, 0
      %p194 = por %p192, %p193
      %p195 = scmp.ne.s32.totalorder %s181, %s182
      %p196 = scmp.eq.s32.totalorder %s32, 2
      %p197 = por %p195, %p196
      %p199 = scmp.ne.s32.totalorder %s182, %s198
      %p200 = scmp.eq.s32.totalorder %s32, 0
      %p201 = por %p199, %p200
      %p202 = scmp.le.s32.totalorder 1, %s26
      %p203 = scmp.lt.s32.totalorder %s26, 4
      %p204 = pnand %p202, %p203
      %p205 = pneg %p204
      // Predicated region
      $region9: #{tpu_custom_call.1} parent=5 // pred_check
        _
      $region10: #{tpu_custom_call.1} parent=5 // pred_check_branch
        %207 = sbr.rel (%p204) target = $region12
      $region11: #{tpu_custom_call.1} parent=5 // pred_region
        %s208 = ssub.s32 %s26, 1
      $region12: #{tpu_custom_call.1} parent=5 // pred_fallthru
        _
      %p209 = scmp.lt.s32.totalorder %s26, 3
      // Predicated region
      $region13: #{tpu_custom_call.1} parent=5 // pred_check
        %p210 = pneg %p209
      $region14: #{tpu_custom_call.1} parent=5 // pred_check_branch
        %212 = sbr.rel (%p210) target = $region16
      $region15: #{tpu_custom_call.1} parent=5 // pred_region
        // Predicated region
        $region17: #{tpu_custom_call.1} parent=15 // pred_check
          %p213 = pneg %p48
        $region18: #{tpu_custom_call.1} parent=15 // pred_check_branch
          %215 = sbr.rel (%p213) target = $region20
        $region19: #{tpu_custom_call.1} parent=15 // pred_region
          %s216 = sld [smem:[#allocation4 + %s26]]
          %s217 = smul.u32 2, %s216
          %p218 = scmp.lt.s32.totalorder %s217, 5
          %s219 = scalar_select %p218, %s217, 5
          %s220 = smul.addr %s219, 4
          %s221 = scalar_lea.vmem %s2, %s220
          %s222 = sld [smem:[#allocation4 + %s26]]
          %s223 = smul.u32 2, %s222
        $region20: #{tpu_custom_call.1} parent=15 // pred_fallthru
          _
        // Predicated region
        $region21: #{tpu_custom_call.1} parent=15 // pred_check
          %p224 = pneg %p76
        $region22: #{tpu_custom_call.1} parent=15 // pred_check_branch
          %226 = sbr.rel (%p224) target = $region24
        $region23: #{tpu_custom_call.1} parent=15 // pred_region
          %s227 = sld [smem:[#allocation4 + %s26]]
          %s228 = smul.u32 2, %s227
          %p229 = scmp.lt.s32.totalorder %s228, 5
          %s230 = scalar_select %p229, %s228, 5
          %s231 = smul.addr %s230, 4
          %s232 = scalar_lea.vmem %s3, %s231
          %s233 = sld [smem:[#allocation4 + %s26]]
          %s234 = smul.u32 2, %s233
        $region24: #{tpu_custom_call.1} parent=15 // pred_fallthru
          _
        // Predicated region
        $region25: #{tpu_custom_call.1} parent=15 // pred_check
          %p235 = pneg %p104
        $region26: #{tpu_custom_call.1} parent=15 // pred_check_branch
          %237 = sbr.rel (%p235) target = $region28
        $region27: #{tpu_custom_call.1} parent=15 // pred_region
          %s238 = sld [smem:[#allocation3 + %s26]]
          %p239 = scmp.lt.s32.totalorder %s238, 2
          %s240 = scalar_select %p239, %s238, 2
          %s241 = smul.addr %s240, 2
          %s242 = smul.addr %s241, 4
          %s243 = scalar_lea.vmem %s4, %s242
          %s244 = sld [smem:[#allocation3 + %s26]]
        $region28: #{tpu_custom_call.1} parent=15 // pred_fallthru
          _
        // Predicated region
        $region29: #{tpu_custom_call.1} parent=15 // pred_check
          %p245 = pneg %p132
        $region30: #{tpu_custom_call.1} parent=15 // pred_check_branch
          %247 = sbr.rel (%p245) target = $region32
        $region31: #{tpu_custom_call.1} parent=15 // pred_region
          %s248 = sld [smem:[#allocation3 + %s26]]
          %p249 = scmp.lt.s32.totalorder %s248, 2
          %s250 = scalar_select %p249, %s248, 2
          %s251 = smul.addr %s250, 4
          %s252 = scalar_lea.vmem %s5, %s251
          %s253 = sld [smem:[#allocation3 + %s26]]
        $region32: #{tpu_custom_call.1} parent=15 // pred_fallthru
          _
        // Predicated region
        $region33: #{tpu_custom_call.1} parent=15 // pred_check
          %p254 = pneg %p160
        $region34: #{tpu_custom_call.1} parent=15 // pred_check_branch
          %256 = sbr.rel (%p254) target = $region36
        $region35: #{tpu_custom_call.1} parent=15 // pred_region
          %s257 = sld [smem:[#allocation3 + %s26]]
          %p258 = scmp.lt.s32.totalorder %s257, 2
          %s259 = scalar_select %p258, %s257, 2
          %s260 = scalar_lea.vmem %s6, %s259
          %s261 = sld [smem:[#allocation3 + %s26]]
        $region36: #{tpu_custom_call.1} parent=15 // pred_fallthru
          _
      $region16: #{tpu_custom_call.1} parent=5 // pred_fallthru
        _
      %p262 = scmp.le.s32.totalorder 1, %s26
      %p263 = scmp.lt.s32.totalorder %s26, 4
      %p264 = pnand %p262, %p263
      %p265 = pneg %p264
      // Predicated region
      $region37: #{tpu_custom_call.1} parent=5 // pred_check
        _
      $region38: #{tpu_custom_call.1} parent=5 // pred_check_branch
        %267 = sbr.rel (%p264) target = $region40
      $region39: #{tpu_custom_call.1} parent=5 // pred_region
        %s268 = ssub.s32 %s26, 1
        %s269 = sld [smem:[#allocation4 + %s31]]
        %s270 = smul.u32 2, %s269
        %p271 = scmp.lt.s32.totalorder %s270, 5
        %s272 = scalar_select %p271, %s270, 5
        %s273 = smul.addr %s272, 4
        %s274 = scalar_lea.vmem %s2, %s273
        %p275 = pneg %p54
        %p276 = pneg %p51
        %s277 = sld [smem:[#allocation4 + %s31]]
        %s278 = smul.u32 2, %s277
        %p279 = scmp.lt.s32.totalorder %s278, 5
        %s280 = scalar_select %p279, %s278, 5
        %s281 = smul.addr %s280, 4
        %s282 = scalar_lea.vmem %s3, %s281
        %p283 = pneg %p82
        %p284 = pneg %p79
        %s285 = sld [smem:[#allocation3 + %s31]]
        %p286 = scmp.lt.s32.totalorder %s285, 2
        %s287 = scalar_select %p286, %s285, 2
        %s288 = smul.addr %s287, 2
        %s289 = smul.addr %s288, 4
        %s290 = scalar_lea.vmem %s4, %s289
        %p291 = pneg %p110
        %p292 = pneg %p107
        %s293 = sld [smem:[#allocation3 + %s31]]
        %p294 = scmp.lt.s32.totalorder %s293, 2
        %s295 = scalar_select %p294, %s293, 2
        %s296 = smul.addr %s295, 4
        %s297 = scalar_lea.vmem %s5, %s296
        %p298 = pneg %p138
        %p299 = pneg %p135
        %s300 = sld [smem:[#allocation3 + %s31]]
        %p301 = scmp.lt.s32.totalorder %s300, 2
        %s302 = scalar_select %p301, %s300, 2
        %s303 = scalar_lea.vmem %s6, %s302
        %p304 = pneg %p166
        %p305 = pneg %p163
        %p306 = pneg %p194
        %p307 = pneg %p191
        %s308 = sand.u32 %s181, 1
        %s309 = scalar_lea.sflag [#allocation6], %s308
        %s310 = sand.u32 %s181, 1
        %s311 = smul.addr %s310, 8
        %s312 = scalar_lea.vmem [#allocation5], %s311
        %s313 = sld [smem:[#allocation4 + %s31]]
        %s314 = smul.u32 2, %s313
        %p315 = scmp.lt.s32.totalorder %s314, 5
        %s316 = scalar_select %p315, %s314, 5
        %s317 = smul.addr %s316, 4
        %s318 = scalar_lea.vmem %s2, %s317
        %s319 = sld [smem:[#allocation4 + %s31]]
        %s320 = smul.u32 2, %s319
        %s321 = sld [smem:[#allocation4 + %s31]]
        %s322 = smul.u32 2, %s321
        %p323 = scmp.lt.s32.totalorder %s322, 5
        %s324 = scalar_select %p323, %s322, 5
        %s325 = smul.addr %s324, 4
        %s326 = scalar_lea.vmem %s3, %s325
        %s327 = sld [smem:[#allocation4 + %s31]]
        %s328 = smul.u32 2, %s327
        %s329 = sld [smem:[#allocation3 + %s31]]
        %p330 = scmp.lt.s32.totalorder %s329, 2
        %s331 = scalar_select %p330, %s329, 2
        %s332 = smul.addr %s331, 2
        %s333 = smul.addr %s332, 4
        %s334 = scalar_lea.vmem %s4, %s333
        %s335 = sld [smem:[#allocation3 + %s31]]
        %s336 = sld [smem:[#allocation3 + %s31]]
        %p337 = scmp.lt.s32.totalorder %s336, 2
        %s338 = scalar_select %p337, %s336, 2
        %s339 = smul.addr %s338, 4
        %s340 = scalar_lea.vmem %s5, %s339
        %s341 = sld [smem:[#allocation3 + %s31]]
        %s342 = sld [smem:[#allocation3 + %s31]]
        %p343 = scmp.lt.s32.totalorder %s342, 2
        %s344 = scalar_select %p343, %s342, 2
        %s345 = scalar_lea.vmem %s6, %s344
        %s346 = sld [smem:[#allocation3 + %s31]]
        %s347 = sld [smem:[#allocation4 + %s31]]
        %s348 = smul.u32 2, %s347
        %v350 = vld [vmem:[%s318] sm:$0xf]
        %v351 = vld [vmem:[%s318 + $0x4] sm:$0xf]
        %v352 = vld [vmem:[%s334] sm:$0xf]
        %v353 = vld [vmem:[%s334 + $0x4] sm:$0x7]
        %v354 = vld [vmem:[%s326] sm:$0xf]
        %v355 = vld [vmem:[%s326 + $0x4] sm:$0xf]
        %v356 = vld [vmem:[%s340] sm:$0xf]
        %v359 = vunpack.c.l.b16 %v354
        %v360 = vunpack.c.l.b16 %v355
        %v361 = vpack.c.b16 %v360, %v359
        %vm362 = vcmask 56320
        %v364 = vsel %vm362, %v361, 0
        %vm366 = vcmask 1042432
        %vm367 = vcmask 1043456
        %v368 = vsel %vm366, 4294967295, 65535
        %v369 = vsel %vm367, %v368, 0
        %v371 = vand.u32 %v356, %v369
        %373 = vmatprep.subr.bf16.mxu0 0
        %374 = vmatpush1.bf16.msra.mxu0 %v371
        %375 = vmatprep.subr.bf16.mxu0 0
        %376 = vmatpush1.bf16.msra.mxu0 0
        %377 = vmatprep.subr.bf16.mxu0 0
        %378 = vmatpush1.bf16.msra.mxu0 0
        %379 = vmatprep.subr.bf16.mxu0 0
        %380 = vmatpush1.bf16.msra.mxu0 0
        %381 = vmatprep.subr.bf16.mxu0 0
        %382 = vmatpush1.bf16.msra.mxu0 0
        %383 = vmatprep.subr.bf16.mxu0 0
        %384 = vmatpush1.bf16.msra.mxu0 0
        %385 = vmatprep.subr.bf16.mxu0 0
        %386 = vmatpush1.bf16.msra.mxu0 0
        %387 = vmatprep.subr.bf16.mxu0 0
        %388 = vmatpush1.bf16.msra.mxu0 0
        %389 = vmatprep.subr.bf16.mxu0 0
        %390 = vmatpush1.bf16.msra.mxu0 0
        %391 = vmatprep.subr.bf16.mxu0 0
        %392 = vmatpush1.bf16.msra.mxu0 0
        %393 = vmatprep.subr.bf16.mxu0 0
        %394 = vmatpush1.bf16.msra.mxu0 0
        %395 = vmatprep.subr.bf16.mxu0 0
        %396 = vmatpush1.bf16.msra.mxu0 0
        %397 = vmatprep.subr.bf16.mxu0 0
        %398 = vmatpush1.bf16.msra.mxu0 0
        %399 = vmatprep.subr.bf16.mxu0 0
        %400 = vmatpush1.bf16.msra.mxu0 0
        %401 = vmatprep.subr.bf16.mxu0 0
        %402 = vmatpush1.bf16.msra.mxu0 0
        %403 = vmatprep.subr.bf16.mxu0 0
        %404 = vmatpush1.bf16.msra.mxu0 0
        %405 = vmatprep.mubr.bf16.mxu0 0
        %406 = vmatmul.mubr.bf16.gmra.mrb[0].mxu0 %v364
        %v407 = vpop.f32.mrb[0].mxu0
        %v408 = vadd.f32 0.0, %v407
        %v409 = vpop.f32.mrb[0].mxu0
        %v410 = vpop.f32.mrb[0].mxu0
        %v411 = vadd.f32 0.0, %v410
        %v412 = vpop.f32.mrb[0].mxu0
        %413 = vdwg.mxu0
        %v416 = vunpack.c.l.b16 %v350
        %v417 = vunpack.c.l.b16 %v351
        %v418 = vpack.c.b16 %v417, %v416
        %v421 = vunpack.c.l.b16 %v352
        %v422 = vunpack.c.l.b16 %v353
        %v423 = vpack.c.b16 %v422, %v421
        %vm424 = vcmask 113664
        %v426 = vsel %vm424, %v418, 0
        %vm428 = vcmask 1046528
        %v430 = vsel %vm428, %v423, 0
        %432 = vmatprep.subr.bf16.mxu0 0
        %433 = vmatpush1.bf16.msra.mxu0 %v430
        %434 = vmatprep.subr.bf16.mxu0 0
        %435 = vmatpush1.bf16.msra.mxu0 0
        %436 = vmatprep.subr.bf16.mxu0 0
        %437 = vmatpush1.bf16.msra.mxu0 0
        %438 = vmatprep.subr.bf16.mxu0 0
        %439 = vmatpush1.bf16.msra.mxu0 0
        %440 = vmatprep.subr.bf16.mxu0 0
        %441 = vmatpush1.bf16.msra.mxu0 0
        %442 = vmatprep.subr.bf16.mxu0 0
        %443 = vmatpush1.bf16.msra.mxu0 0
        %444 = vmatprep.subr.bf16.mxu0 0
        %445 = vmatpush1.bf16.msra.mxu0 0
        %446 = vmatprep.subr.bf16.mxu0 0
        %447 = vmatpush1.bf16.msra.mxu0 0
        %448 = vmatprep.subr.bf16.mxu0 0
        %449 = vmatpush1.bf16.msra.mxu0 0
        %450 = vmatprep.subr.bf16.mxu0 0
        %451 = vmatpush1.bf16.msra.mxu0 0
        %452 = vmatprep.subr.bf16.mxu0 0
        %453 = vmatpush1.bf16.msra.mxu0 0
        %454 = vmatprep.subr.bf16.mxu0 0
        %455 = vmatpush1.bf16.msra.mxu0 0
        %456 = vmatprep.subr.bf16.mxu0 0
        %457 = vmatpush1.bf16.msra.mxu0 0
        %458 = vmatprep.subr.bf16.mxu0 0
        %459 = vmatpush1.bf16.msra.mxu0 0
        %460 = vmatprep.subr.bf16.mxu0 0
        %461 = vmatpush1.bf16.msra.mxu0 0
        %462 = vmatprep.subr.bf16.mxu0 0
        %463 = vmatpush1.bf16.msra.mxu0 0
        %464 = vmatprep.mubr.bf16.mxu0 0
        %465 = vmatmul.mubr.bf16.gmra.mrb[0].mxu0 %v426
        %v466 = vpop.f32.mrb[0].mxu0
        %v467 = vadd.f32 %v408, %v466
        %v468 = vpop.f32.mrb[0].mxu0
        %v469 = vpop.f32.mrb[0].mxu0
        %v470 = vadd.f32 %v411, %v469
        %v471 = vpop.f32.mrb[0].mxu0
        %472 = vdwg.mxu0
        %v473 = vld [vmem:[%s345] sm:$0x1]
        %v475 = vlaneseq
        %v476 = vshrl.u32 %v475, 7
        %v477 = vsub.s32 0, %v476
        %v478 = vrot.slane %v473, %v477
        %v480 = vadd.f32 %v467, %v478
        %v481 = vadd.f32 %v470, %v478
        %vm482 = vcmp.ge.f32.partialorder %v480, 0.0
        %vm483 = vcmp.ge.f32.partialorder %v481, 0.0
        %v484 = vmul.f32 %v480, 0.9
        %v485 = vmul.f32 %v481, 0.9
        %v486 = vsel %vm482, %v480, %v484
        %v487 = vsel %vm483, %v481, %v485
        %v488 = vpack.c.bf16 %v487, %v486
        %v490 = vunpack.c.l.b16 %v488
        %v491 = vunpack.c.h.b16 %v488
        %v492 = vpack.c.b16 %v490, %v490
        %v493 = vpack.c.b16 %v491, %v491
        %496 = vst [vmem:[%s312] sm:$0xf] %v492
        %497 = vst [vmem:[%s312 + $0x4] sm:$0xf] %v493
        %s498 = sand.u32 %s181, 1
        %s499 = scalar_lea.sflag [#allocation6], %s498
        %s500 = sand.u32 %s181, 1
        %s501 = smul.addr %s500, 8
        %s502 = scalar_lea.vmem [#allocation5], %s501
        // Predicated region
        $region41: #{tpu_custom_call.1} parent=39 // pred_check
          %p503 = pneg %p191
        $region42: #{tpu_custom_call.1} parent=39 // pred_check_branch
          %505 = sbr.rel (%p503) target = $region44
        $region43: #{tpu_custom_call.1} parent=39 // pred_region
          %s506 = sld [smem:[#allocation4 + %s31]]
          %s507 = smul.u32 2, %s506
          %s509 = ssub.s32 128, 128
          %510 = vsyncadd %s499, %s509
          %s511 = smul.addr %s507, 64
          %s512 = scalar_lea.hbm %s7, %s511
          %s513 = sshll.u32 %s502, 4
          %s514 = int_to_ptr.vmem [resolvable:$true] %s513
          %519 = dma.vmem_to_hbm [thread:$0]  %s514, 128, %s512, %s499, 64, 64, 4
        $region44: #{tpu_custom_call.1} parent=39 // pred_fallthru
          _
      $region40: #{tpu_custom_call.1} parent=5 // pred_fallthru
        _
      %p520 = scmp.le.s32.totalorder 2, %s26
      // Predicated region
      $region45: #{tpu_custom_call.1} parent=5 // pred_check
        %p521 = pneg %p520
      $region46: #{tpu_custom_call.1} parent=5 // pred_check_branch
        %523 = sbr.rel (%p521) target = $region48
      $region47: #{tpu_custom_call.1} parent=5 // pred_region
        %s524 = ssub.s32 %s26, 2
        // Predicated region
        $region49: #{tpu_custom_call.1} parent=47 // pred_check
          %p525 = pneg %p197
        $region50: #{tpu_custom_call.1} parent=47 // pred_check_branch
          %527 = sbr.rel (%p525) target = $region52
        $region51: #{tpu_custom_call.1} parent=47 // pred_region
          %s528 = sand.u32 %s182, 1
          %s529 = scalar_lea.sflag [#allocation6], %s528
          %s530 = sand.u32 %s182, 1
          %s531 = smul.addr %s530, 8
          %s532 = scalar_lea.vmem [#allocation5], %s531
          %533 = dma.done %s529, 128
        $region52: #{tpu_custom_call.1} parent=47 // pred_fallthru
          _
      $region48: #{tpu_custom_call.1} parent=5 // pred_fallthru
        _
    $region6: #{tpu_custom_call.1} parent=1 // loop_footer
      %s30 = sadd.s32 1, %s26
    $region7: #{tpu_custom_call.1} parent=1 // loop_footer_branch
      %25 = sbr.rel target = $region3
    $region8: #{tpu_custom_call.1} parent=1 // loop_exit
      _
    %534 = vsyncpa [#allocation6], 1
    %s535 = scalar_lea.sflag [#allocation6], 1
    %536 = vsyncpa %s535, 1

</llo_original>
